<compile_context>
chip_gen: v7x
topology: tpu7x:2x2x1
jax: 0.10.0
libtpu: 0.0.40
codegen_flags: <defaults>
</compile_context>

<pallas_src>
import math

import jax
import jax.numpy as jnp
from jax.experimental import pallas as pl
from jax.experimental.pallas import tpu as pltpu


def _diff_kernel(*refs):
    """refs = (in_0, ..., in_{n-1}, out); computes out[i] = in_{i+1} - in_i."""
    n = len(refs) - 1
    in_refs = refs[:n]
    out_ref = refs[n]
    prev = in_refs[0][...]
    for i in range(1, n):
        cur = in_refs[i][...]          # each tile loaded exactly once
        out_ref[i - 1, :, :] = cur - prev
        prev = cur


def _vmem_budget_and_limit():
    """Generation-aware VMEM budget for the double-buffered working set."""
    cap = None
    try:
        cap = int(pltpu.get_tpu_info().vmem_capacity_bytes)
    except Exception:
        cap = None
    if not cap or cap <= 0:
        cap = 64 * 1024 * 1024  # conservative: v7x per-TC VMEM
    # Past ~1 MiB/input tile there is no roofline gain, so cap the working
    # set at 48 MiB (v5e/v6e: 128 MiB physical) and at ~half of VMEM on v7x.
    budget = max(12 * 1024 * 1024, min(cap // 2, 48 * 1024 * 1024))
    limit = min(cap, budget + 16 * 1024 * 1024)
    return budget, limit


def _pick_tiling(total_elems, itemsize, n_inputs, budget_bytes):
    """Pick a lane-dense padded 2D view (R, C) and row-tile size tr."""
    # Lane width: a nice multiple of 128 dividing the flat size if possible.
    C = None
    for cand in (2048, 1024, 512, 256, 128):
        if total_elems % cand == 0:
            C = cand
            break
    if C is None:
        # Pad up to a multiple of C instead of a masked full-row fallback.
        C = 1024 if total_elems >= 1024 else 128
    total_pad = -(-total_elems // C) * C
    R = total_pad // C

    # Sub-32-bit dtypes pack 16/32 rows per vreg sublane.
    min_rows = {4: 8, 2: 16, 1: 32}.get(itemsize, 8)

    # Double-buffered N input tiles + one (N-1)-slice output tile.
    bytes_per_row_all_bufs = 2 * (2 * n_inputs - 1) * C * itemsize
    max_tr = max(min_rows, budget_bytes // bytes_per_row_all_bufs)

    if R <= min_rows:
        tr = R  # block equal to the full dim is always legal
    else:
        tr = min(R, max_tr)
        tr = max(min_rows, (tr // min_rows) * min_rows)
        # v7x: keep >= 2 grid steps for mid-size problems so both TCs stream.
        out_bytes = (n_inputs - 1) * R * C * itemsize
        if out_bytes > 4 * 1024 * 1024 and tr >= R:
            half = -(-R // 2)
            tr = max(min_rows, (half // min_rows) * min_rows)
    return R, C, tr, total_pad


def diff_layer(inputs):
    """JAX/Pallas equivalent of Diff_Layer.forward.

    inputs: sequence of arrays with identical shape/dtype.
    returns: array of shape (len(inputs)-1, *inputs[0].shape),
             out[i] = inputs[i+1] - inputs[i].
    """
    inputs = [jnp.asarray(x) for x in inputs]
    n = len(inputs)
    if n < 2:
        raise ValueError("diff along dim=0 needs at least 2 stacked inputs")
    shape = tuple(inputs[0].shape)
    dtype = inputs[0].dtype
    for x in inputs:
        if tuple(x.shape) != shape or x.dtype != dtype:
            raise ValueError("all inputs must share the same shape and dtype "
                             "(torch.stack requirement)")
    itemsize = jnp.dtype(dtype).itemsize
    total = math.prod(shape) if shape else 1

    budget_bytes, vmem_limit = _vmem_budget_and_limit()
    R, C, tr, total_pad = _pick_tiling(total, itemsize, n, budget_bytes)

    # Flatten (metadata-only for contiguous arrays); pad only when the flat
    # size is not a multiple of the lane width.
    def _to_2d(x):
        flat = jnp.reshape(x, (total,))
        if total_pad != total:
            flat = jnp.pad(flat, (0, total_pad - total))
        return jnp.reshape(flat, (R, C))

    xs = [_to_2d(x) for x in inputs]

    grid = (pl.cdiv(R, tr),)
    in_specs = [pl.BlockSpec((tr, C), lambda r: (r, 0)) for _ in range(n)]
    out_specs = pl.BlockSpec((n - 1, tr, C), lambda r: (0, r, 0))

    out2d = pl.pallas_call(
        _diff_kernel,
        out_shape=jax.ShapeDtypeStruct((n - 1, R, C), dtype),
        grid_spec=pltpu.PrefetchScalarGridSpec(
            num_scalar_prefetch=0,
            grid=grid,
            in_specs=in_specs,
            out_specs=out_specs,
        ),
        compiler_params=pltpu.CompilerParams(
            # Each grid step writes a disjoint output row-tile -> truly
            # parallel (lets v7x shard across its 2 TensorCores).
            dimension_semantics=("parallel",),
            vmem_limit_bytes=vmem_limit,
        ),
        cost_estimate=pl.CostEstimate(
            flops=(n - 1) * total,
            transcendentals=0,
            bytes_accessed=(2 * n - 1) * total * itemsize,
        ),
    )(*xs)

    out_flat = jnp.reshape(out2d, (n - 1, total_pad))
    if total_pad != total:
        out_flat = out_flat[:, :total]
    return jnp.reshape(out_flat, (n - 1,) + shape)


if __name__ == "__main__":
    key = jax.random.PRNGKey(0)
    k_a, k_b, k_c, k_d = jax.random.split(key, 4)

    # Case 1: small shapes consistent with the module: 4 stacked (2, 8, 32).
    N, B, T, D = 4, 2, 8, 32
    keys = jax.random.split(k_a, N)
    inputs = [jax.random.normal(k, (B, T, D), dtype=jnp.float32) for k in keys]
    out = jax.block_until_ready(diff_layer(inputs))
    ref = jnp.diff(jnp.stack(inputs, axis=0), axis=0)
    assert out.shape == (N - 1, B, T, D), out.shape
    assert jnp.allclose(out, ref, atol=1e-6), "mismatch vs reference (case 1)"

    # Case 2: wide lane-dense path (D % 128 == 0).
    N2, B2, T2, D2 = 3, 4, 16, 128
    keys2 = jax.random.split(k_b, N2)
    inputs2 = [jax.random.normal(k, (B2, T2, D2), dtype=jnp.float32) for k in keys2]
    out2 = jax.block_until_ready(diff_layer(inputs2))
    ref2 = jnp.diff(jnp.stack(inputs2, axis=0), axis=0)
    assert out2.shape == (N2 - 1, B2, T2, D2), out2.shape
    assert jnp.allclose(out2, ref2, atol=1e-6), "mismatch vs reference (case 2)"

    # Case 3: non-128-divisible flat size -> exercises the padding path.
    N3 = 3
    keys3 = jax.random.split(k_c, N3)
    inputs3 = [jax.random.normal(k, (2, 5, 7), dtype=jnp.float32) for k in keys3]
    out3 = jax.block_until_ready(diff_layer(inputs3))
    ref3 = jnp.diff(jnp.stack(inputs3, axis=0), axis=0)
    assert out3.shape == (N3 - 1, 2, 5, 7), out3.shape
    assert jnp.allclose(out3, ref3, atol=1e-6), "mismatch vs reference (case 3)"

    # Case 4: bf16 path (dtype-aware sublane minimum, 16 rows).
    N4 = 3
    keys4 = jax.random.split(k_d, N4)
    inputs4 = [jax.random.normal(k, (8, 16, 256), dtype=jnp.bfloat16) for k in keys4]
    out4 = jax.block_until_ready(diff_layer(inputs4))
    ref4 = jnp.diff(jnp.stack(inputs4, axis=0), axis=0)
    assert out4.shape == (N4 - 1, 8, 16, 256), out4.shape
    assert jnp.allclose(out4.astype(jnp.float32), ref4.astype(jnp.float32),
                        atol=1e-2), "mismatch vs reference (case 4)"

    print("KERNEL_OK")
</pallas_src>

<mosaic_0001>
module attributes {stable_mosaic.version = 11 : i64} {
  func.func @_diff_kernel(%arg0: i32, %arg1: memref<1x512xf32, #tpu.memory_space<vmem>>, %arg2: memref<1x512xf32, #tpu.memory_space<vmem>>, %arg3: memref<1x512xf32, #tpu.memory_space<vmem>>, %arg4: memref<1x512xf32, #tpu.memory_space<vmem>>, %arg5: memref<3x1x512xf32, #tpu.memory_space<vmem>>) attributes {dimension_semantics = [#tpu.dimension_semantics<parallel>], iteration_bounds = array<i64: 1>, scalar_prefetch = 0 : i64, scratch_operands = 0 : i64, tpu.core_type = #tpu.core_type<tc>, window_params = [{transform_indices = @transform_0, window_bounds = array<i64: 1, 512>}, {transform_indices = @transform_1, window_bounds = array<i64: 1, 512>}, {transform_indices = @transform_2, window_bounds = array<i64: 1, 512>}, {transform_indices = @transform_3, window_bounds = array<i64: 1, 512>}, {transform_indices = @transform_4, window_bounds = array<i64: 3, 1, 512>}]} {
    %c0 = arith.constant 0 : index
    %c0_0 = arith.constant 0 : index
    %0 = vector.load %arg1[%c0, %c0_0] : memref<1x512xf32, #tpu.memory_space<vmem>>, vector<1x512xf32>
    %c0_1 = arith.constant 0 : index
    %c0_2 = arith.constant 0 : index
    %1 = vector.load %arg2[%c0_1, %c0_2] : memref<1x512xf32, #tpu.memory_space<vmem>>, vector<1x512xf32>
    %2 = arith.subf %1, %0 : vector<1x512xf32>
    %c0_3 = arith.constant 0 : index
    %c0_4 = arith.constant 0 : index
    %c0_5 = arith.constant 0 : index
    %3 = vector.load %arg5[%c0_3, %c0_4, %c0_5] : memref<3x1x512xf32, #tpu.memory_space<vmem>>, vector<1x1x512xf32>
    %4 = vector.shape_cast %3 : vector<1x1x512xf32> to vector<1x512xf32>
    %5 = vector.shape_cast %2 : vector<1x512xf32> to vector<1x1x512xf32>
    tpu.vector_store %arg5[%c0_3, %c0_4, %c0_5], %5 {strides = array<i32>} : memref<3x1x512xf32, #tpu.memory_space<vmem>>, vector<1x1x512xf32>,
    %c0_6 = arith.constant 0 : index
    %c0_7 = arith.constant 0 : index
    %6 = vector.load %arg3[%c0_6, %c0_7] : memref<1x512xf32, #tpu.memory_space<vmem>>, vector<1x512xf32>
    %7 = arith.subf %6, %1 : vector<1x512xf32>
    %c1 = arith.constant 1 : index
    %c0_8 = arith.constant 0 : index
    %c0_9 = arith.constant 0 : index
    %8 = vector.load %arg5[%c1, %c0_8, %c0_9] : memref<3x1x512xf32, #tpu.memory_space<vmem>>, vector<1x1x512xf32>
    %9 = vector.shape_cast %8 : vector<1x1x512xf32> to vector<1x512xf32>
    %10 = vector.shape_cast %7 : vector<1x512xf32> to vector<1x1x512xf32>
    tpu.vector_store %arg5[%c1, %c0_8, %c0_9], %10 {strides = array<i32>} : memref<3x1x512xf32, #tpu.memory_space<vmem>>, vector<1x1x512xf32>,
    %c0_10 = arith.constant 0 : index
    %c0_11 = arith.constant 0 : index
    %11 = vector.load %arg4[%c0_10, %c0_11] : memref<1x512xf32, #tpu.memory_space<vmem>>, vector<1x512xf32>
    %12 = arith.subf %11, %6 : vector<1x512xf32>
    %c2 = arith.constant 2 : index
    %c0_12 = arith.constant 0 : index
    %c0_13 = arith.constant 0 : index
    %13 = vector.load %arg5[%c2, %c0_12, %c0_13] : memref<3x1x512xf32, #tpu.memory_space<vmem>>, vector<1x1x512xf32>
    %14 = vector.shape_cast %13 : vector<1x1x512xf32> to vector<1x512xf32>
    %15 = vector.shape_cast %12 : vector<1x512xf32> to vector<1x1x512xf32>
    tpu.vector_store %arg5[%c2, %c0_12, %c0_13], %15 {strides = array<i32>} : memref<3x1x512xf32, #tpu.memory_space<vmem>>, vector<1x1x512xf32>,
    return
  }
  func.func @transform_0(%arg0: i32) -> (i32, i32) {
    %c0_i32 = arith.constant 0 : i32
    %c0_i32_0 = arith.constant 0 : i32
    return %arg0, %c0_i32 : i32, i32
  }
  func.func @transform_1(%arg0: i32) -> (i32, i32) {
    %c0_i32 = arith.constant 0 : i32
    %c0_i32_0 = arith.constant 0 : i32
    return %arg0, %c0_i32 : i32, i32
  }
  func.func @transform_2(%arg0: i32) -> (i32, i32) {
    %c0_i32 = arith.constant 0 : i32
    %c0_i32_0 = arith.constant 0 : i32
    return %arg0, %c0_i32 : i32, i32
  }
  func.func @transform_3(%arg0: i32) -> (i32, i32) {
    %c0_i32 = arith.constant 0 : i32
    %c0_i32_0 = arith.constant 0 : i32
    return %arg0, %c0_i32 : i32, i32
  }
  func.func @transform_4(%arg0: i32) -> (i32, i32, i32) {
    %c0_i32 = arith.constant 0 : i32
    %c0_i32_0 = arith.constant 0 : i32
    %c0_i32_1 = arith.constant 0 : i32
    return %c0_i32, %arg0, %c0_i32_0 : i32, i32, i32
  }
}

</mosaic_0001>

<llo_original>
// kernel: tpu_custom_call.1
$region0: #{tpu_custom_call.1}
  #allocation0 [shape = 'u32[]', space=smem, size = 0x4, offset = 0x4, fixed_abs, tag = 'smem constant byte address 0x4 - core index']
  #allocation1 [shape = 'u32[144,128]{1,0:T(1,128)}', space=vmem, size = 0x12000, scoped, tag = 'internal scratch']
  %s0 = inlined_call_operand.hbm [shape: f32[1,512], index: 0, kind: input, shape index: {}]
  %s1 = inlined_call_operand.hbm [shape: f32[1,512], index: 1, kind: input, shape index: {}]
  %s2 = inlined_call_operand.vmem [shape: f32[1,512], index: 2, kind: input, shape index: {}]
  %s3 = inlined_call_operand.vmem [shape: f32[1,512], index: 3, kind: input, shape index: {}]
  %s4 = inlined_call_operand.hbm [shape: f32[3,1,512], index: 4, kind: output, shape index: {}]
  %s5 = sld [smem:[#allocation0]]
  $region34: #{tpu_custom_call.1} parent=0
    _
  %s7 = ssub.s32 1, %s5
  %s8 = scalar_select 0, %s7, %s5
  $region1: #{tpu_custom_call.1} parent=0
    #allocation2 [shape = 'u8[2048]{0}', space=vmem, size = 0x800, scoped, tag = 'input window, operand 0, single buffered']
    #allocation3 [shape = 's32[1]{0}', space=sflag, size = 0x4, scoped, tag = 'scoped memory for tpu_custom_call.1']
    #allocation4 [shape = 's32[1]{0}', space=sflag, size = 0x4, scoped, tag = 'scoped memory for tpu_custom_call.1']
    #allocation5 [shape = 'u8[2048]{0}', space=vmem, size = 0x800, scoped, tag = 'input window, operand 1, single buffered']
    #allocation6 [shape = 's32[1]{0}', space=sflag, size = 0x4, scoped, tag = 'scoped memory for tpu_custom_call.1']
    #allocation7 [shape = 'u8[6144]{0}', space=vmem, size = 0x1800, scoped, tag = 'output window, operand 0, single buffered']
    %9 = vsyncpa [#allocation3], 0
    %10 = vsyncpa [#allocation6], 0
    %11 = vsyncpa [#allocation4], 0
    // Predicated region
    $region2: #{tpu_custom_call.1} parent=1 // pred_check
      _
    $region3: #{tpu_custom_call.1} parent=1 // pred_check_branch
      %13 = sbr.rel (0) target = $region5
    $region4: #{tpu_custom_call.1} parent=1 // pred_region
      %s15 = ssub.s32 64, 64
      %16 = vsyncadd [#allocation3], %s15
      %s18 = sshll.u32 [#allocation2], 4
      %s19 = int_to_ptr.vmem [resolvable:$true] %s18
      %21 = dma.hbm_to_vmem [thread:$0]  %s0, 64, %s19, [#allocation3]
    $region5: #{tpu_custom_call.1} parent=1 // pred_fallthru
      _
    // Predicated region
    $region6: #{tpu_custom_call.1} parent=1 // pred_check
      _
    $region7: #{tpu_custom_call.1} parent=1 // pred_check_branch
      %23 = sbr.rel (0) target = $region9
    $region8: #{tpu_custom_call.1} parent=1 // pred_region
      %s25 = ssub.s32 64, 64
      %26 = vsyncadd [#allocation6], %s25
      %s28 = sshll.u32 [#allocation5], 4
      %s29 = int_to_ptr.vmem [resolvable:$true] %s28
      %31 = dma.hbm_to_vmem [thread:$0]  %s1, 64, %s29, [#allocation6]
    $region9: #{tpu_custom_call.1} parent=1 // pred_fallthru
      _
    // Predicated region
    $region10: #{tpu_custom_call.1} parent=1 // pred_check
      _
    $region11: #{tpu_custom_call.1} parent=1 // pred_check_branch
      %33 = sbr.rel (0) target = $region13
    $region12: #{tpu_custom_call.1} parent=1 // pred_region
      _
    $region13: #{tpu_custom_call.1} parent=1 // pred_fallthru
      _
    // Predicated region
    $region14: #{tpu_custom_call.1} parent=1 // pred_check
      _
    $region15: #{tpu_custom_call.1} parent=1 // pred_check_branch
      %35 = sbr.rel (0) target = $region17
    $region16: #{tpu_custom_call.1} parent=1 // pred_region
      _
    $region17: #{tpu_custom_call.1} parent=1 // pred_fallthru
      _
    // Predicated region
    $region18: #{tpu_custom_call.1} parent=1 // pred_check
      _
    $region19: #{tpu_custom_call.1} parent=1 // pred_check_branch
      %37 = sbr.rel (0) target = $region21
    $region20: #{tpu_custom_call.1} parent=1 // pred_region
      %38 = dma.done [#allocation3], 64
    $region21: #{tpu_custom_call.1} parent=1 // pred_fallthru
      _
    // Predicated region
    $region22: #{tpu_custom_call.1} parent=1 // pred_check
      _
    $region23: #{tpu_custom_call.1} parent=1 // pred_check_branch
      %40 = sbr.rel (0) target = $region25
    $region24: #{tpu_custom_call.1} parent=1 // pred_region
      %41 = dma.done [#allocation6], 64
    $region25: #{tpu_custom_call.1} parent=1 // pred_fallthru
      _
    %v42 = vld [vmem:[#allocation2] sm:$0xf]
    %v43 = vld [vmem:[#allocation5] sm:$0xf]
    %v44 = vsub.f32 %v43, %v42
    %v45 = vlaneseq
    %vm46 = vcmp.ge.s32.totalorder %v45, 0
    %vm47 = vcmp.lt.s32.totalorder %v45, 512
    %vm48 = vmand %vm46, %vm47
    %49 = vst.msk [vmem:[#allocation7] sm:$0xf] %vm48, %v44
    %v50 = vld [vmem:[%s2] sm:$0xf]
    %v51 = vsub.f32 %v50, %v43
    %s52 = scalar_lea.vmem [#allocation7], 4
    %53 = vst.msk [vmem:[%s52] sm:$0xf] %vm48, %v51
    %v54 = vld [vmem:[%s3] sm:$0xf]
    %v55 = vsub.f32 %v54, %v50
    %s56 = scalar_lea.vmem [#allocation7], 8
    %57 = vst.msk [vmem:[%s56] sm:$0xf] %vm48, %v55
    // Predicated region
    $region26: #{tpu_custom_call.1} parent=1 // pred_check
      _
    $region27: #{tpu_custom_call.1} parent=1 // pred_check_branch
      %59 = sbr.rel (0) target = $region29
    $region28: #{tpu_custom_call.1} parent=1 // pred_region
      %s61 = ssub.s32 192, 192
      %62 = vsyncadd [#allocation4], %s61
      %s63 = sshll.u32 [#allocation7], 4
      %s64 = int_to_ptr.vmem [resolvable:$true] %s63
      %69 = dma.vmem_to_hbm [thread:$0]  %s64, 192, %s4, [#allocation4], 64, 64, 4
    $region29: #{tpu_custom_call.1} parent=1 // pred_fallthru
      _
    // Predicated region
    $region30: #{tpu_custom_call.1} parent=1 // pred_check
      _
    $region31: #{tpu_custom_call.1} parent=1 // pred_check_branch
      %71 = sbr.rel (0) target = $region33
    $region32: #{tpu_custom_call.1} parent=1 // pred_region
      %72 = dma.done [#allocation4], 192
    $region33: #{tpu_custom_call.1} parent=1 // pred_fallthru
      _
    %73 = vsyncpa [#allocation3], 1
    %74 = vsyncpa [#allocation6], 1
    %75 = vsyncpa [#allocation4], 1

</llo_original>
